<compile_context>
chip_gen: v7x
topology: tpu7x:2x2x1
jax: 0.10.0
libtpu: 0.0.40
codegen_flags: <defaults>
</compile_context>

<pallas_src>
import jax
import jax.numpy as jnp
from jax.experimental import pallas as pl
from jax.experimental.pallas import tpu as pltpu

PATCH = 8
LVL = 255.0
PACK = 2                       # patches packed per row
LANE = PACK * PATCH * PATCH    # 128 -> full lane width


def _round_up(n, m):
    return (n + m - 1) // m * m


def _dct_matrix(n=PATCH):
    # Orthonormal DCT-II matrix D so that 2D-DCT(X) = D @ X @ D.T (norm='ortho')
    k = jnp.arange(n, dtype=jnp.float32)[:, None]
    m = jnp.arange(n, dtype=jnp.float32)[None, :]
    d = jnp.cos(jnp.pi * (2.0 * m + 1.0) * k / (2.0 * n))
    scale = jnp.where(k == 0, jnp.sqrt(1.0 / n), jnp.sqrt(2.0 / n))
    return (d * scale).astype(jnp.float32)


def _quant_mats(quality=85):
    mat50Y = jnp.array(
        [[16, 11, 10, 16, 24, 40, 51, 61],
         [12, 12, 14, 19, 26, 58, 60, 55],
         [14, 13, 16, 24, 40, 57, 69, 56],
         [14, 17, 22, 29, 51, 87, 80, 62],
         [18, 22, 37, 56, 68, 109, 103, 77],
         [24, 35, 55, 64, 81, 104, 113, 92],
         [49, 64, 78, 87, 103, 121, 120, 101],
         [72, 92, 95, 98, 112, 100, 103, 99]], dtype=jnp.float32)
    mat50C = jnp.array(
        [[17, 18, 24, 47, 99, 99, 99, 99],
         [18, 21, 26, 66, 99, 99, 99, 99],
         [24, 26, 56, 99, 99, 99, 99, 99],
         [47, 66, 99, 99, 99, 99, 99, 99],
         [99, 99, 99, 99, 99, 99, 99, 99],
         [99, 99, 99, 99, 99, 99, 99, 99],
         [99, 99, 99, 99, 99, 99, 99, 99],
         [99, 99, 99, 99, 99, 99, 99, 99]], dtype=jnp.float32)
    q = max(1, min(100, quality))
    sf = 5000.0 / q if q < 50 else 200.0 - q * 2.0
    qy = jnp.clip((mat50Y * sf + 50.0) / 100.0, 1.0, 255.0)
    qc = jnp.clip((mat50C * sf + 50.0) / 100.0, 1.0, 255.0)
    # module applies Quantize (round) to the tables in __init__
    return jnp.round(qy), jnp.round(qc)


def _folded_matrices(quality, channels):
    """Per-channel (LANE, LANE) forward / inverse DCT with quant table folded in."""
    D = _dct_matrix(PATCH)
    M = jnp.kron(D, D)                     # row-major vec: dct = x @ M.T
    qy, qc = _quant_mats(quality)
    # PyTorch transposes each patch (transpose(2,4)) before dividing by Qmat;
    # working in natural (row, col) patch order with Q^T is mathematically identical.
    q_list = [qy.T, qc.T, qc.T][:channels]
    eye = jnp.eye(PACK, dtype=jnp.float32)
    mf, mb = [], []
    for q in q_list:
        qf = q.reshape(-1)                             # (64,)
        mf64 = M.T * (1.0 / qf)[None, :]               # forward DCT, 1/Q folded in
        mb64 = qf[:, None] * M                         # dequant folded into inverse DCT
        mf.append(jnp.kron(eye, mf64))                 # block-diagonal (128, 128)
        mb.append(jnp.kron(eye, mb64))
    return jnp.stack(mf), jnp.stack(mb)                # (C, 128, 128) each


def _jpeg_kernel_rgb(x_ref, mf_ref, mb_ref, o_ref):
    # x_ref/o_ref: (3, TN, 128) flattened packed 8x8 patches, input in [-1, 1].
    # mf_ref/mb_ref: (3, 128, 128) folded forward / inverse DCT matrices.
    r = x_ref[0] * 127.5 + 127.5
    g = x_ref[1] * 127.5 + 127.5
    b = x_ref[2] * 127.5 + 127.5
    y = jnp.round(0.256788 * r + 0.504129 * g + 0.0979059 * b + 16.0)
    cb = jnp.round(128.0 - 0.148224 * r - 0.290992 * g + 0.439216 * b)
    cr = jnp.round(128.0 + 0.439216 * r - 0.367788 * g - 0.0714275 * b)
    rec = []
    for c, ch in enumerate((y, cb, cr)):
        d = jnp.round(jnp.dot(ch - 128.0, mf_ref[c],
                              preferred_element_type=jnp.float32))
        rec.append(jnp.dot(d, mb_ref[c],
                           preferred_element_type=jnp.float32) + 128.0)
    yy = rec[0] - 16.0
    cbb = rec[1] - 128.0
    crr = rec[2] - 128.0
    inv = jnp.float32(1.0 / LVL)
    o_ref[0] = jnp.round(1.16438 * yy + 3.01124e-07 * cbb + 1.59603 * crr) * inv
    o_ref[1] = jnp.round(1.16438 * yy - 0.391763 * cbb - 0.812968 * crr) * inv
    o_ref[2] = jnp.round(1.16438 * yy + 2.01723 * cbb + 3.05426e-06 * crr) * inv


def _jpeg_kernel_gray(x_ref, mf_ref, mb_ref, o_ref):
    # Single-channel path: no color conversion / extra rounds (matches module).
    x = x_ref[0] * 127.5 + 127.5
    d = jnp.round(jnp.dot(x - 128.0, mf_ref[0], preferred_element_type=jnp.float32))
    rec = jnp.dot(d, mb_ref[0], preferred_element_type=jnp.float32) + 128.0
    o_ref[0] = rec * jnp.float32(1.0 / LVL)


def jpeg_layer(img, quality=85):
    img = img.astype(jnp.float32)
    B, C, H, W = img.shape
    assert H % PATCH == 0 and W % PATCH == 0
    assert C in (1, 3)

    hb, wb = H // PATCH, W // PATCH
    N = B * hb * wb                                   # 8x8 blocks per channel

    # Unfold raw [-1,1] image into per-channel flattened 8x8 patches
    # (row-major patch order, same as F.unfold). All elementwise work is in-kernel.
    blk = img.reshape(B, C, hb, PATCH, wb, PATCH)
    blk = blk.transpose(1, 0, 2, 4, 3, 5).reshape(C, N, PATCH * PATCH)

    # Pack PACK patches per row (lane dim = 128); choose a large row-tile TN that
    # divides the (minimally padded) row count so no partial blocks are needed.
    N2 = -(-N // PACK)
    N2pad = _round_up(N2, 8)
    TN = min(2048, N2pad)
    while N2pad % TN:
        TN -= 8
    if TN < 256 and N2pad > 1024:                     # awkward factorization: keep tiles big
        TN = 1024
        N2pad = _round_up(N2, TN)
    Npad = PACK * N2pad
    if Npad != N:
        blk = jnp.pad(blk, ((0, 0), (0, Npad - N), (0, 0)))
    packed = blk.reshape(C, N2pad, LANE)

    mf, mb = _folded_matrices(quality, C)
    kernel = _jpeg_kernel_rgb if C == 3 else _jpeg_kernel_gray

    out = pl.pallas_call(
        kernel,
        out_shape=jax.ShapeDtypeStruct((C, N2pad, LANE), jnp.float32),
        grid_spec=pltpu.PrefetchScalarGridSpec(
            num_scalar_prefetch=0,
            grid=(N2pad // TN,),                      # 1-D grid: even TC sharding on v7x
            in_specs=[
                pl.BlockSpec((C, TN, LANE), lambda i: (0, i, 0)),
                pl.BlockSpec((C, LANE, LANE), lambda i: (0, 0, 0)),
                pl.BlockSpec((C, LANE, LANE), lambda i: (0, 0, 0)),
            ],
            out_specs=pl.BlockSpec((C, TN, LANE), lambda i: (0, i, 0)),
        ),
        compiler_params=pltpu.CompilerParams(
            dimension_semantics=("parallel",),
            vmem_limit_bytes=48 * 1024 * 1024),
    )(packed, mf, mb)

    # Fold back to NCHW (inverse of the unfold above).
    out_blk = out.reshape(C, Npad, PATCH * PATCH)
    if Npad != N:
        out_blk = out_blk[:, :N, :]
    out = out_blk.reshape(C, B, hb, wb, PATCH, PATCH).transpose(1, 0, 2, 4, 3, 5)
    return out.reshape(B, C, H, W)


if __name__ == "__main__":
    key = jax.random.PRNGKey(0)
    x = jax.random.uniform(key, (2, 3, 16, 16), dtype=jnp.float32,
                           minval=-1.0, maxval=1.0)
    out = jax.jit(jpeg_layer)(x)
    out = jax.block_until_ready(out)
    assert out.shape == x.shape
    assert bool(jnp.all(jnp.isfinite(out)))
    print("KERNEL_OK")
</pallas_src>

<mosaic_0001>
module attributes {stable_mosaic.version = 11 : i64} {
  func.func @_jpeg_kernel_rgb(%arg0: i32, %arg1: memref<3x8x128xf32, #tpu.memory_space<vmem>>, %arg2: memref<3x128x128xf32, #tpu.memory_space<vmem>>, %arg3: memref<3x128x128xf32, #tpu.memory_space<vmem>>, %arg4: memref<3x8x128xf32, #tpu.memory_space<vmem>>) attributes {dimension_semantics = [#tpu.dimension_semantics<parallel>], iteration_bounds = array<i64: 1>, scalar_prefetch = 0 : i64, scratch_operands = 0 : i64, tpu.core_type = #tpu.core_type<tc>, window_params = [{transform_indices = @transform_0, window_bounds = array<i64: 3, 8, 128>}, {pipeline_mode = #tpu.pipeline_mode<synchronous>, transform_indices = @transform_1, window_bounds = array<i64: 3, 128, 128>}, {pipeline_mode = #tpu.pipeline_mode<synchronous>, transform_indices = @transform_2, window_bounds = array<i64: 3, 128, 128>}, {transform_indices = @transform_3, window_bounds = array<i64: 3, 8, 128>}]} {
    %c0 = arith.constant 0 : index
    %c0_0 = arith.constant 0 : index
    %c0_1 = arith.constant 0 : index
    %0 = vector.load %arg1[%c0, %c0_0, %c0_1] : memref<3x8x128xf32, #tpu.memory_space<vmem>>, vector<1x8x128xf32>
    %1 = vector.shape_cast %0 : vector<1x8x128xf32> to vector<8x128xf32>
    %cst = arith.constant 1.275000e+02 : f32
    %2 = vector.broadcast %cst : f32 to vector<8x128xf32>
    %3 = arith.mulf %1, %2 : vector<8x128xf32>
    %cst_2 = arith.constant 1.275000e+02 : f32
    %4 = vector.broadcast %cst_2 : f32 to vector<8x128xf32>
    %5 = arith.addf %3, %4 : vector<8x128xf32>
    %c1 = arith.constant 1 : index
    %c0_3 = arith.constant 0 : index
    %c0_4 = arith.constant 0 : index
    %6 = vector.load %arg1[%c1, %c0_3, %c0_4] : memref<3x8x128xf32, #tpu.memory_space<vmem>>, vector<1x8x128xf32>
    %7 = vector.shape_cast %6 : vector<1x8x128xf32> to vector<8x128xf32>
    %cst_5 = arith.constant 1.275000e+02 : f32
    %8 = vector.broadcast %cst_5 : f32 to vector<8x128xf32>
    %9 = arith.mulf %7, %8 : vector<8x128xf32>
    %cst_6 = arith.constant 1.275000e+02 : f32
    %10 = vector.broadcast %cst_6 : f32 to vector<8x128xf32>
    %11 = arith.addf %9, %10 : vector<8x128xf32>
    %c2 = arith.constant 2 : index
    %c0_7 = arith.constant 0 : index
    %c0_8 = arith.constant 0 : index
    %12 = vector.load %arg1[%c2, %c0_7, %c0_8] : memref<3x8x128xf32, #tpu.memory_space<vmem>>, vector<1x8x128xf32>
    %13 = vector.shape_cast %12 : vector<1x8x128xf32> to vector<8x128xf32>
    %cst_9 = arith.constant 1.275000e+02 : f32
    %14 = vector.broadcast %cst_9 : f32 to vector<8x128xf32>
    %15 = arith.mulf %13, %14 : vector<8x128xf32>
    %cst_10 = arith.constant 1.275000e+02 : f32
    %16 = vector.broadcast %cst_10 : f32 to vector<8x128xf32>
    %17 = arith.addf %15, %16 : vector<8x128xf32>
    %cst_11 = arith.constant 2.567880e-01 : f32
    %18 = vector.broadcast %cst_11 : f32 to vector<8x128xf32>
    %19 = arith.mulf %18, %5 : vector<8x128xf32>
    %cst_12 = arith.constant 5.041290e-01 : f32
    %20 = vector.broadcast %cst_12 : f32 to vector<8x128xf32>
    %21 = arith.mulf %20, %11 : vector<8x128xf32>
    %22 = arith.addf %19, %21 : vector<8x128xf32>
    %cst_13 = arith.constant 0.0979058966 : f32
    %23 = vector.broadcast %cst_13 : f32 to vector<8x128xf32>
    %24 = arith.mulf %23, %17 : vector<8x128xf32>
    %25 = arith.addf %22, %24 : vector<8x128xf32>
    %cst_14 = arith.constant 1.600000e+01 : f32
    %26 = vector.broadcast %cst_14 : f32 to vector<8x128xf32>
    %27 = arith.addf %25, %26 : vector<8x128xf32>
    %28 = math.roundeven %27 : vector<8x128xf32>
    %cst_15 = arith.constant 1.482240e-01 : f32
    %29 = vector.broadcast %cst_15 : f32 to vector<8x128xf32>
    %30 = arith.mulf %29, %5 : vector<8x128xf32>
    %cst_16 = arith.constant 1.280000e+02 : f32
    %31 = vector.broadcast %cst_16 : f32 to vector<8x128xf32>
    %32 = arith.subf %31, %30 : vector<8x128xf32>
    %cst_17 = arith.constant 2.909920e-01 : f32
    %33 = vector.broadcast %cst_17 : f32 to vector<8x128xf32>
    %34 = arith.mulf %33, %11 : vector<8x128xf32>
    %35 = arith.subf %32, %34 : vector<8x128xf32>
    %cst_18 = arith.constant 4.392160e-01 : f32
    %36 = vector.broadcast %cst_18 : f32 to vector<8x128xf32>
    %37 = arith.mulf %36, %17 : vector<8x128xf32>
    %38 = arith.addf %35, %37 : vector<8x128xf32>
    %39 = math.roundeven %38 : vector<8x128xf32>
    %cst_19 = arith.constant 4.392160e-01 : f32
    %40 = vector.broadcast %cst_19 : f32 to vector<8x128xf32>
    %41 = arith.mulf %40, %5 : vector<8x128xf32>
    %cst_20 = arith.constant 1.280000e+02 : f32
    %42 = vector.broadcast %cst_20 : f32 to vector<8x128xf32>
    %43 = arith.addf %42, %41 : vector<8x128xf32>
    %cst_21 = arith.constant 3.677880e-01 : f32
    %44 = vector.broadcast %cst_21 : f32 to vector<8x128xf32>
    %45 = arith.mulf %44, %11 : vector<8x128xf32>
    %46 = arith.subf %43, %45 : vector<8x128xf32>
    %cst_22 = arith.constant 7.142750e-02 : f32
    %47 = vector.broadcast %cst_22 : f32 to vector<8x128xf32>
    %48 = arith.mulf %47, %17 : vector<8x128xf32>
    %49 = arith.subf %46, %48 : vector<8x128xf32>
    %50 = math.roundeven %49 : vector<8x128xf32>
    %cst_23 = arith.constant 1.280000e+02 : f32
    %51 = vector.broadcast %cst_23 : f32 to vector<8x128xf32>
    %52 = arith.subf %28, %51 : vector<8x128xf32>
    %c0_24 = arith.constant 0 : index
    %c0_25 = arith.constant 0 : index
    %c0_26 = arith.constant 0 : index
    %53 = vector.load %arg2[%c0_24, %c0_25, %c0_26] : memref<3x128x128xf32, #tpu.memory_space<vmem>>, vector<1x128x128xf32>
    %54 = vector.shape_cast %53 : vector<1x128x128xf32> to vector<128x128xf32>
    %cst_27 = arith.constant dense<0.000000e+00> : vector<8x128xf32>
    %55 = tpu.matmul %52, %54, %cst_27 {dimension_numbers = #tpu.dot_dimension_numbers<[1], [0], [0], [1], [0, 0, 1, 1], [], []>} : vector<8x128xf32>, vector<128x128xf32>, vector<8x128xf32> -> vector<8x128xf32>
    %56 = math.roundeven %55 : vector<8x128xf32>
    %c0_28 = arith.constant 0 : index
    %c0_29 = arith.constant 0 : index
    %c0_30 = arith.constant 0 : index
    %57 = vector.load %arg3[%c0_28, %c0_29, %c0_30] : memref<3x128x128xf32, #tpu.memory_space<vmem>>, vector<1x128x128xf32>
    %58 = vector.shape_cast %57 : vector<1x128x128xf32> to vector<128x128xf32>
    %cst_31 = arith.constant dense<0.000000e+00> : vector<8x128xf32>
    %59 = tpu.matmul %56, %58, %cst_31 {dimension_numbers = #tpu.dot_dimension_numbers<[1], [0], [0], [1], [0, 0, 1, 1], [], []>} : vector<8x128xf32>, vector<128x128xf32>, vector<8x128xf32> -> vector<8x128xf32>
    %cst_32 = arith.constant 1.280000e+02 : f32
    %60 = vector.broadcast %cst_32 : f32 to vector<8x128xf32>
    %61 = arith.addf %59, %60 : vector<8x128xf32>
    %cst_33 = arith.constant 1.280000e+02 : f32
    %62 = vector.broadcast %cst_33 : f32 to vector<8x128xf32>
    %63 = arith.subf %39, %62 : vector<8x128xf32>
    %c1_34 = arith.constant 1 : index
    %c0_35 = arith.constant 0 : index
    %c0_36 = arith.constant 0 : index
    %64 = vector.load %arg2[%c1_34, %c0_35, %c0_36] : memref<3x128x128xf32, #tpu.memory_space<vmem>>, vector<1x128x128xf32>
    %65 = vector.shape_cast %64 : vector<1x128x128xf32> to vector<128x128xf32>
    %cst_37 = arith.constant dense<0.000000e+00> : vector<8x128xf32>
    %66 = tpu.matmul %63, %65, %cst_37 {dimension_numbers = #tpu.dot_dimension_numbers<[1], [0], [0], [1], [0, 0, 1, 1], [], []>} : vector<8x128xf32>, vector<128x128xf32>, vector<8x128xf32> -> vector<8x128xf32>
    %67 = math.roundeven %66 : vector<8x128xf32>
    %c1_38 = arith.constant 1 : index
    %c0_39 = arith.constant 0 : index
    %c0_40 = arith.constant 0 : index
    %68 = vector.load %arg3[%c1_38, %c0_39, %c0_40] : memref<3x128x128xf32, #tpu.memory_space<vmem>>, vector<1x128x128xf32>
    %69 = vector.shape_cast %68 : vector<1x128x128xf32> to vector<128x128xf32>
    %cst_41 = arith.constant dense<0.000000e+00> : vector<8x128xf32>
    %70 = tpu.matmul %67, %69, %cst_41 {dimension_numbers = #tpu.dot_dimension_numbers<[1], [0], [0], [1], [0, 0, 1, 1], [], []>} : vector<8x128xf32>, vector<128x128xf32>, vector<8x128xf32> -> vector<8x128xf32>
    %cst_42 = arith.constant 1.280000e+02 : f32
    %71 = vector.broadcast %cst_42 : f32 to vector<8x128xf32>
    %72 = arith.addf %70, %71 : vector<8x128xf32>
    %cst_43 = arith.constant 1.280000e+02 : f32
    %73 = vector.broadcast %cst_43 : f32 to vector<8x128xf32>
    %74 = arith.subf %50, %73 : vector<8x128xf32>
    %c2_44 = arith.constant 2 : index
    %c0_45 = arith.constant 0 : index
    %c0_46 = arith.constant 0 : index
    %75 = vector.load %arg2[%c2_44, %c0_45, %c0_46] : memref<3x128x128xf32, #tpu.memory_space<vmem>>, vector<1x128x128xf32>
    %76 = vector.shape_cast %75 : vector<1x128x128xf32> to vector<128x128xf32>
    %cst_47 = arith.constant dense<0.000000e+00> : vector<8x128xf32>
    %77 = tpu.matmul %74, %76, %cst_47 {dimension_numbers = #tpu.dot_dimension_numbers<[1], [0], [0], [1], [0, 0, 1, 1], [], []>} : vector<8x128xf32>, vector<128x128xf32>, vector<8x128xf32> -> vector<8x128xf32>
    %78 = math.roundeven %77 : vector<8x128xf32>
    %c2_48 = arith.constant 2 : index
    %c0_49 = arith.constant 0 : index
    %c0_50 = arith.constant 0 : index
    %79 = vector.load %arg3[%c2_48, %c0_49, %c0_50] : memref<3x128x128xf32, #tpu.memory_space<vmem>>, vector<1x128x128xf32>
    %80 = vector.shape_cast %79 : vector<1x128x128xf32> to vector<128x128xf32>
    %cst_51 = arith.constant dense<0.000000e+00> : vector<8x128xf32>
    %81 = tpu.matmul %78, %80, %cst_51 {dimension_numbers = #tpu.dot_dimension_numbers<[1], [0], [0], [1], [0, 0, 1, 1], [], []>} : vector<8x128xf32>, vector<128x128xf32>, vector<8x128xf32> -> vector<8x128xf32>
    %cst_52 = arith.constant 1.280000e+02 : f32
    %82 = vector.broadcast %cst_52 : f32 to vector<8x128xf32>
    %83 = arith.addf %81, %82 : vector<8x128xf32>
    %cst_53 = arith.constant 1.600000e+01 : f32
    %84 = vector.broadcast %cst_53 : f32 to vector<8x128xf32>
    %85 = arith.subf %61, %84 : vector<8x128xf32>
    %cst_54 = arith.constant 1.280000e+02 : f32
    %86 = vector.broadcast %cst_54 : f32 to vector<8x128xf32>
    %87 = arith.subf %72, %86 : vector<8x128xf32>
    %cst_55 = arith.constant 1.280000e+02 : f32
    %88 = vector.broadcast %cst_55 : f32 to vector<8x128xf32>
    %89 = arith.subf %83, %88 : vector<8x128xf32>
    %cst_56 = arith.constant 1.164380e+00 : f32
    %90 = vector.broadcast %cst_56 : f32 to vector<8x128xf32>
    %91 = arith.mulf %90, %85 : vector<8x128xf32>
    %cst_57 = arith.constant 3.011240e-07 : f32
    %92 = vector.broadcast %cst_57 : f32 to vector<8x128xf32>
    %93 = arith.mulf %92, %87 : vector<8x128xf32>
    %94 = arith.addf %91, %93 : vector<8x128xf32>
    %cst_58 = arith.constant 1.596030e+00 : f32
    %95 = vector.broadcast %cst_58 : f32 to vector<8x128xf32>
    %96 = arith.mulf %95, %89 : vector<8x128xf32>
    %97 = arith.addf %94, %96 : vector<8x128xf32>
    %98 = math.roundeven %97 : vector<8x128xf32>
    %cst_59 = arith.constant 0.00392156886 : f32
    %99 = vector.broadcast %cst_59 : f32 to vector<8x128xf32>
    %100 = arith.mulf %98, %99 : vector<8x128xf32>
    %c0_60 = arith.constant 0 : index
    %c0_61 = arith.constant 0 : index
    %c0_62 = arith.constant 0 : index
    %101 = vector.load %arg4[%c0_60, %c0_61, %c0_62] : memref<3x8x128xf32, #tpu.memory_space<vmem>>, vector<1x8x128xf32>
    %102 = vector.shape_cast %101 : vector<1x8x128xf32> to vector<8x128xf32>
    %103 = vector.shape_cast %100 : vector<8x128xf32> to vector<1x8x128xf32>
    tpu.vector_store %arg4[%c0_60, %c0_61, %c0_62], %103 {strides = array<i32>} : memref<3x8x128xf32, #tpu.memory_space<vmem>>, vector<1x8x128xf32>,
    %cst_63 = arith.constant 1.164380e+00 : f32
    %104 = vector.broadcast %cst_63 : f32 to vector<8x128xf32>
    %105 = arith.mulf %104, %85 : vector<8x128xf32>
    %cst_64 = arith.constant 3.917630e-01 : f32
    %106 = vector.broadcast %cst_64 : f32 to vector<8x128xf32>
    %107 = arith.mulf %106, %87 : vector<8x128xf32>
    %108 = arith.subf %105, %107 : vector<8x128xf32>
    %cst_65 = arith.constant 8.129680e-01 : f32
    %109 = vector.broadcast %cst_65 : f32 to vector<8x128xf32>
    %110 = arith.mulf %109, %89 : vector<8x128xf32>
    %111 = arith.subf %108, %110 : vector<8x128xf32>
    %112 = math.roundeven %111 : vector<8x128xf32>
    %cst_66 = arith.constant 0.00392156886 : f32
    %113 = vector.broadcast %cst_66 : f32 to vector<8x128xf32>
    %114 = arith.mulf %112, %113 : vector<8x128xf32>
    %c1_67 = arith.constant 1 : index
    %c0_68 = arith.constant 0 : index
    %c0_69 = arith.constant 0 : index
    %115 = vector.load %arg4[%c1_67, %c0_68, %c0_69] : memref<3x8x128xf32, #tpu.memory_space<vmem>>, vector<1x8x128xf32>
    %116 = vector.shape_cast %115 : vector<1x8x128xf32> to vector<8x128xf32>
    %117 = vector.shape_cast %114 : vector<8x128xf32> to vector<1x8x128xf32>
    tpu.vector_store %arg4[%c1_67, %c0_68, %c0_69], %117 {strides = array<i32>} : memref<3x8x128xf32, #tpu.memory_space<vmem>>, vector<1x8x128xf32>,
    %cst_70 = arith.constant 1.164380e+00 : f32
    %118 = vector.broadcast %cst_70 : f32 to vector<8x128xf32>
    %119 = arith.mulf %118, %85 : vector<8x128xf32>
    %cst_71 = arith.constant 2.017230e+00 : f32
    %120 = vector.broadcast %cst_71 : f32 to vector<8x128xf32>
    %121 = arith.mulf %120, %87 : vector<8x128xf32>
    %122 = arith.addf %119, %121 : vector<8x128xf32>
    %cst_72 = arith.constant 3.054260e-06 : f32
    %123 = vector.broadcast %cst_72 : f32 to vector<8x128xf32>
    %124 = arith.mulf %123, %89 : vector<8x128xf32>
    %125 = arith.addf %122, %124 : vector<8x128xf32>
    %126 = math.roundeven %125 : vector<8x128xf32>
    %cst_73 = arith.constant 0.00392156886 : f32
    %127 = vector.broadcast %cst_73 : f32 to vector<8x128xf32>
    %128 = arith.mulf %126, %127 : vector<8x128xf32>
    %c2_74 = arith.constant 2 : index
    %c0_75 = arith.constant 0 : index
    %c0_76 = arith.constant 0 : index
    %129 = vector.load %arg4[%c2_74, %c0_75, %c0_76] : memref<3x8x128xf32, #tpu.memory_space<vmem>>, vector<1x8x128xf32>
    %130 = vector.shape_cast %129 : vector<1x8x128xf32> to vector<8x128xf32>
    %131 = vector.shape_cast %128 : vector<8x128xf32> to vector<1x8x128xf32>
    tpu.vector_store %arg4[%c2_74, %c0_75, %c0_76], %131 {strides = array<i32>} : memref<3x8x128xf32, #tpu.memory_space<vmem>>, vector<1x8x128xf32>,
    return
  }
  func.func @transform_0(%arg0: i32) -> (i32, i32, i32) {
    %c0_i32 = arith.constant 0 : i32
    %c0_i32_0 = arith.constant 0 : i32
    %c0_i32_1 = arith.constant 0 : i32
    return %c0_i32, %arg0, %c0_i32_0 : i32, i32, i32
  }
  func.func @transform_1(%arg0: i32) -> (i32, i32, i32) {
    %c0_i32 = arith.constant 0 : i32
    %c0_i32_0 = arith.constant 0 : i32
    %c0_i32_1 = arith.constant 0 : i32
    %c0_i32_2 = arith.constant 0 : i32
    return %c0_i32, %c0_i32_0, %c0_i32_1 : i32, i32, i32
  }
  func.func @transform_2(%arg0: i32) -> (i32, i32, i32) {
    %c0_i32 = arith.constant 0 : i32
    %c0_i32_0 = arith.constant 0 : i32
    %c0_i32_1 = arith.constant 0 : i32
    %c0_i32_2 = arith.constant 0 : i32
    return %c0_i32, %c0_i32_0, %c0_i32_1 : i32, i32, i32
  }
  func.func @transform_3(%arg0: i32) -> (i32, i32, i32) {
    %c0_i32 = arith.constant 0 : i32
    %c0_i32_0 = arith.constant 0 : i32
    %c0_i32_1 = arith.constant 0 : i32
    return %c0_i32, %arg0, %c0_i32_0 : i32, i32, i32
  }
}

</mosaic_0001>

<llo_original>
// kernel: jpeg_layer.1
$region0: #{jpeg_layer.1}
  #allocation0 [shape = 'u32[]', space=smem, size = 0x4, offset = 0x4, fixed_abs, tag = 'smem constant byte address 0x4 - core index']
  #allocation1 [shape = 'u32[144,128]{1,0:T(1,128)}', space=vmem, size = 0x12000, scoped, tag = 'internal scratch']
  %s0 = inlined_call_operand.vmem [shape: f32[3,8,128], index: 0, kind: input, shape index: {}]
  %s1 = inlined_call_operand.vmem [shape: f32[3,128,128], index: 1, kind: input, shape index: {}]
  %s2 = inlined_call_operand.vmem [shape: f32[3,128,128], index: 2, kind: input, shape index: {}]
  %s3 = inlined_call_operand.vmem [shape: f32[3,8,128], index: 3, kind: output, shape index: {}]
  %s4 = sld [smem:[#allocation0]]
  $region22: #{jpeg_layer.1} parent=0
    _
  %s6 = ssub.s32 1, %s4
  %s7 = scalar_select 0, %s6, %s4
  // Predicated region
  $region2: #{jpeg_layer.1} parent=0 // pred_check
    _
  $region3: #{jpeg_layer.1} parent=0 // pred_check_branch
    %9 = sbr.rel (0) target = $region5
  $region4: #{jpeg_layer.1} parent=0 // pred_region
    _
  $region5: #{jpeg_layer.1} parent=0 // pred_fallthru
    _
  // Predicated region
  $region6: #{jpeg_layer.1} parent=0 // pred_check
    _
  $region7: #{jpeg_layer.1} parent=0 // pred_check_branch
    %11 = sbr.rel (0) target = $region9
  $region8: #{jpeg_layer.1} parent=0 // pred_region
    _
  $region9: #{jpeg_layer.1} parent=0 // pred_fallthru
    _
  // Predicated region
  $region10: #{jpeg_layer.1} parent=0 // pred_check
    _
  $region11: #{jpeg_layer.1} parent=0 // pred_check_branch
    %13 = sbr.rel (0) target = $region13
  $region12: #{jpeg_layer.1} parent=0 // pred_region
    _
  $region13: #{jpeg_layer.1} parent=0 // pred_fallthru
    _
  %v14 = vld [vmem:[%s0] sm:$0xff]
  %v15 = vmul.f32 %v14, 127.5
  %v16 = vadd.f32 %v15, 127.5
  %s17 = scalar_lea.vmem %s0, 8
  %v18 = vld [vmem:[%s17] sm:$0xff]
  %v19 = vmul.f32 %v18, 127.5
  %v20 = vadd.f32 %v19, 127.5
  %s21 = scalar_lea.vmem %s0, 16
  %v22 = vld [vmem:[%s21] sm:$0xff]
  %v23 = vmul.f32 %v22, 127.5
  %v24 = vadd.f32 %v23, 127.5
  %v25 = vmul.f32 %v16, 0.256788
  %v26 = vmul.f32 %v20, 0.504129
  %v27 = vadd.f32 %v25, %v26
  %v28 = vmul.f32 %v24, 0.0979059
  %v29 = vadd.f32 %v27, %v28
  %v30 = vadd.f32 %v29, 16.0
  %v31 = vround.ne.pseudo %v30
  %v32 = vmul.f32 %v16, 0.148224
  %v33 = vsub.f32 128.0, %v32
  %v34 = vmul.f32 %v20, 0.290992
  %v35 = vsub.f32 %v33, %v34
  %v36 = vmul.f32 %v24, 0.439216
  %v37 = vadd.f32 %v35, %v36
  %v38 = vround.ne.pseudo %v37
  %v39 = vmul.f32 %v16, 0.439216
  %v40 = vadd.f32 %v39, 128.0
  %v41 = vmul.f32 %v20, 0.367788
  %v42 = vsub.f32 %v40, %v41
  %v43 = vmul.f32 %v24, 0.0714275
  %v44 = vsub.f32 %v42, %v43
  %v45 = vround.ne.pseudo %v44
  %v46 = vsub.f32 %v31, 128.0
  %v47 = vld [vmem:[%s1] sm:$0xff]
  %v48 = vld [vmem:[%s1 + $0x8] sm:$0xff]
  %v49 = vld [vmem:[%s1 + $0x10] sm:$0xff]
  %v50 = vld [vmem:[%s1 + $0x18] sm:$0xff]
  %v51 = vld [vmem:[%s1 + $0x20] sm:$0xff]
  %v52 = vld [vmem:[%s1 + $0x28] sm:$0xff]
  %v53 = vld [vmem:[%s1 + $0x30] sm:$0xff]
  %v54 = vld [vmem:[%s1 + $0x38] sm:$0xff]
  %v55 = vld [vmem:[%s1 + $0x40] sm:$0xff]
  %v56 = vld [vmem:[%s1 + $0x48] sm:$0xff]
  %v57 = vld [vmem:[%s1 + $0x50] sm:$0xff]
  %v58 = vld [vmem:[%s1 + $0x58] sm:$0xff]
  %v59 = vld [vmem:[%s1 + $0x60] sm:$0xff]
  %v60 = vld [vmem:[%s1 + $0x68] sm:$0xff]
  %v61 = vld [vmem:[%s1 + $0x70] sm:$0xff]
  %v62 = vld [vmem:[%s1 + $0x78] sm:$0xff]
  %63 = vmatprep.subr.mxu0 0.0
  %64 = vmatpush1.msra.mxu0 %v47
  %65 = vmatprep.subr.mxu0 0.0
  %66 = vmatpush1.msra.mxu0 %v48
  %67 = vmatprep.subr.mxu0 0.0
  %68 = vmatpush1.msra.mxu0 %v49
  %69 = vmatprep.subr.mxu0 0.0
  %70 = vmatpush1.msra.mxu0 %v50
  %71 = vmatprep.subr.mxu0 0.0
  %72 = vmatpush1.msra.mxu0 %v51
  %73 = vmatprep.subr.mxu0 0.0
  %74 = vmatpush1.msra.mxu0 %v52
  %75 = vmatprep.subr.mxu0 0.0
  %76 = vmatpush1.msra.mxu0 %v53
  %77 = vmatprep.subr.mxu0 0.0
  %78 = vmatpush1.msra.mxu0 %v54
  %79 = vmatprep.subr.mxu0 0.0
  %80 = vmatpush1.msra.mxu0 %v55
  %81 = vmatprep.subr.mxu0 0.0
  %82 = vmatpush1.msra.mxu0 %v56
  %83 = vmatprep.subr.mxu0 0.0
  %84 = vmatpush1.msra.mxu0 %v57
  %85 = vmatprep.subr.mxu0 0.0
  %86 = vmatpush1.msra.mxu0 %v58
  %87 = vmatprep.subr.mxu0 0.0
  %88 = vmatpush1.msra.mxu0 %v59
  %89 = vmatprep.subr.mxu0 0.0
  %90 = vmatpush1.msra.mxu0 %v60
  %91 = vmatprep.subr.mxu0 0.0
  %92 = vmatpush1.msra.mxu0 %v61
  %93 = vmatprep.subr.mxu0 0.0
  %94 = vmatpush1.msra.mxu0 %v62
  %95 = vmatprep.subr.mxu0 0.0
  %96 = vmatpush1.msra.mxu0 0.0
  %97 = vmatprep.subr.mxu0 0.0
  %98 = vmatpush1.msra.mxu0 0.0
  %99 = vmatprep.subr.mxu0 0.0
  %100 = vmatpush1.msra.mxu0 0.0
  %101 = vmatprep.subr.mxu0 0.0
  %102 = vmatpush1.msra.mxu0 0.0
  %103 = vmatprep.subr.mxu0 0.0
  %104 = vmatpush1.msra.mxu0 0.0
  %105 = vmatprep.subr.mxu0 0.0
  %106 = vmatpush1.msra.mxu0 0.0
  %107 = vmatprep.subr.mxu0 0.0
  %108 = vmatpush1.msra.mxu0 0.0
  %109 = vmatprep.subr.mxu0 0.0
  %110 = vmatpush1.msra.mxu0 0.0
  %111 = vmatprep.subr.mxu0 0.0
  %112 = vmatpush1.msra.mxu0 0.0
  %113 = vmatprep.subr.mxu0 0.0
  %114 = vmatpush1.msra.mxu0 0.0
  %115 = vmatprep.subr.mxu0 0.0
  %116 = vmatpush1.msra.mxu0 0.0
  %117 = vmatprep.subr.mxu0 0.0
  %118 = vmatpush1.msra.mxu0 0.0
  %119 = vmatprep.subr.mxu0 0.0
  %120 = vmatpush1.msra.mxu0 0.0
  %121 = vmatprep.subr.mxu0 0.0
  %122 = vmatpush1.msra.mxu0 0.0
  %123 = vmatprep.subr.mxu0 0.0
  %124 = vmatpush1.msra.mxu0 0.0
  %125 = vmatprep.subr.mxu0 0.0
  %126 = vmatpush1.msra.mxu0 0.0
  %127 = vmatprep.mubr.f32.mxu0 0.0
  %128 = vmatmul.mubr.f32.gmra.mrb[0].mxu0 %v46
  %v129 = vpop.f32.mrb[0].mxu0
  %v130 = vadd.f32 0.0, %v129
  %v131 = vpop.f32.mrb[0].mxu0
  %132 = vdwg.mxu0
  %v133 = vround.ne.pseudo %v130
  %v134 = vld [vmem:[%s2] sm:$0xff]
  %v135 = vld [vmem:[%s2 + $0x8] sm:$0xff]
  %v136 = vld [vmem:[%s2 + $0x10] sm:$0xff]
  %v137 = vld [vmem:[%s2 + $0x18] sm:$0xff]
  %v138 = vld [vmem:[%s2 + $0x20] sm:$0xff]
  %v139 = vld [vmem:[%s2 + $0x28] sm:$0xff]
  %v140 = vld [vmem:[%s2 + $0x30] sm:$0xff]
  %v141 = vld [vmem:[%s2 + $0x38] sm:$0xff]
  %v142 = vld [vmem:[%s2 + $0x40] sm:$0xff]
  %v143 = vld [vmem:[%s2 + $0x48] sm:$0xff]
  %v144 = vld [vmem:[%s2 + $0x50] sm:$0xff]
  %v145 = vld [vmem:[%s2 + $0x58] sm:$0xff]
  %v146 = vld [vmem:[%s2 + $0x60] sm:$0xff]
  %v147 = vld [vmem:[%s2 + $0x68] sm:$0xff]
  %v148 = vld [vmem:[%s2 + $0x70] sm:$0xff]
  %v149 = vld [vmem:[%s2 + $0x78] sm:$0xff]
  %150 = vmatprep.subr.mxu0 0.0
  %151 = vmatpush1.msra.mxu0 %v134
  %152 = vmatprep.subr.mxu0 0.0
  %153 = vmatpush1.msra.mxu0 %v135
  %154 = vmatprep.subr.mxu0 0.0
  %155 = vmatpush1.msra.mxu0 %v136
  %156 = vmatprep.subr.mxu0 0.0
  %157 = vmatpush1.msra.mxu0 %v137
  %158 = vmatprep.subr.mxu0 0.0
  %159 = vmatpush1.msra.mxu0 %v138
  %160 = vmatprep.subr.mxu0 0.0
  %161 = vmatpush1.msra.mxu0 %v139
  %162 = vmatprep.subr.mxu0 0.0
  %163 = vmatpush1.msra.mxu0 %v140
  %164 = vmatprep.subr.mxu0 0.0
  %165 = vmatpush1.msra.mxu0 %v141
  %166 = vmatprep.subr.mxu0 0.0
  %167 = vmatpush1.msra.mxu0 %v142
  %168 = vmatprep.subr.mxu0 0.0
  %169 = vmatpush1.msra.mxu0 %v143
  %170 = vmatprep.subr.mxu0 0.0
  %171 = vmatpush1.msra.mxu0 %v144
  %172 = vmatprep.subr.mxu0 0.0
  %173 = vmatpush1.msra.mxu0 %v145
  %174 = vmatprep.subr.mxu0 0.0
  %175 = vmatpush1.msra.mxu0 %v146
  %176 = vmatprep.subr.mxu0 0.0
  %177 = vmatpush1.msra.mxu0 %v147
  %178 = vmatprep.subr.mxu0 0.0
  %179 = vmatpush1.msra.mxu0 %v148
  %180 = vmatprep.subr.mxu0 0.0
  %181 = vmatpush1.msra.mxu0 %v149
  %182 = vmatprep.subr.mxu0 0.0
  %183 = vmatpush1.msra.mxu0 0.0
  %184 = vmatprep.subr.mxu0 0.0
  %185 = vmatpush1.msra.mxu0 0.0
  %186 = vmatprep.subr.mxu0 0.0
  %187 = vmatpush1.msra.mxu0 0.0
  %188 = vmatprep.subr.mxu0 0.0
  %189 = vmatpush1.msra.mxu0 0.0
  %190 = vmatprep.subr.mxu0 0.0
  %191 = vmatpush1.msra.mxu0 0.0
  %192 = vmatprep.subr.mxu0 0.0
  %193 = vmatpush1.msra.mxu0 0.0
  %194 = vmatprep.subr.mxu0 0.0
  %195 = vmatpush1.msra.mxu0 0.0
  %196 = vmatprep.subr.mxu0 0.0
  %197 = vmatpush1.msra.mxu0 0.0
  %198 = vmatprep.subr.mxu0 0.0
  %199 = vmatpush1.msra.mxu0 0.0
  %200 = vmatprep.subr.mxu0 0.0
  %201 = vmatpush1.msra.mxu0 0.0
  %202 = vmatprep.subr.mxu0 0.0
  %203 = vmatpush1.msra.mxu0 0.0
  %204 = vmatprep.subr.mxu0 0.0
  %205 = vmatpush1.msra.mxu0 0.0
  %206 = vmatprep.subr.mxu0 0.0
  %207 = vmatpush1.msra.mxu0 0.0
  %208 = vmatprep.subr.mxu0 0.0
  %209 = vmatpush1.msra.mxu0 0.0
  %210 = vmatprep.subr.mxu0 0.0
  %211 = vmatpush1.msra.mxu0 0.0
  %212 = vmatprep.subr.mxu0 0.0
  %213 = vmatpush1.msra.mxu0 0.0
  %214 = vmatprep.mubr.f32.mxu0 0.0
  %215 = vmatmul.mubr.f32.gmra.mrb[0].mxu0 %v133
  %v216 = vpop.f32.mrb[0].mxu0
  %v217 = vadd.f32 128.0, %v216
  %v218 = vpop.f32.mrb[0].mxu0
  %219 = vdwg.mxu0
  %v220 = vsub.f32 %v38, 128.0
  %s221 = scalar_lea.vmem %s1, 128
  %v222 = vld [vmem:[%s221] sm:$0xff]
  %v223 = vld [vmem:[%s221 + $0x8] sm:$0xff]
  %v224 = vld [vmem:[%s221 + $0x10] sm:$0xff]
  %v225 = vld [vmem:[%s221 + $0x18] sm:$0xff]
  %v226 = vld [vmem:[%s221 + $0x20] sm:$0xff]
  %v227 = vld [vmem:[%s221 + $0x28] sm:$0xff]
  %v228 = vld [vmem:[%s221 + $0x30] sm:$0xff]
  %v229 = vld [vmem:[%s221 + $0x38] sm:$0xff]
  %v230 = vld [vmem:[%s221 + $0x40] sm:$0xff]
  %v231 = vld [vmem:[%s221 + $0x48] sm:$0xff]
  %v232 = vld [vmem:[%s221 + $0x50] sm:$0xff]
  %v233 = vld [vmem:[%s221 + $0x58] sm:$0xff]
  %v234 = vld [vmem:[%s221 + $0x60] sm:$0xff]
  %v235 = vld [vmem:[%s221 + $0x68] sm:$0xff]
  %v236 = vld [vmem:[%s221 + $0x70] sm:$0xff]
  %v237 = vld [vmem:[%s221 + $0x78] sm:$0xff]
  %238 = vmatprep.subr.mxu0 0.0
  %239 = vmatpush1.msra.mxu0 %v222
  %240 = vmatprep.subr.mxu0 0.0
  %241 = vmatpush1.msra.mxu0 %v223
  %242 = vmatprep.subr.mxu0 0.0
  %243 = vmatpush1.msra.mxu0 %v224
  %244 = vmatprep.subr.mxu0 0.0
  %245 = vmatpush1.msra.mxu0 %v225
  %246 = vmatprep.subr.mxu0 0.0
  %247 = vmatpush1.msra.mxu0 %v226
  %248 = vmatprep.subr.mxu0 0.0
  %249 = vmatpush1.msra.mxu0 %v227
  %250 = vmatprep.subr.mxu0 0.0
  %251 = vmatpush1.msra.mxu0 %v228
  %252 = vmatprep.subr.mxu0 0.0
  %253 = vmatpush1.msra.mxu0 %v229
  %254 = vmatprep.subr.mxu0 0.0
  %255 = vmatpush1.msra.mxu0 %v230
  %256 = vmatprep.subr.mxu0 0.0
  %257 = vmatpush1.msra.mxu0 %v231
  %258 = vmatprep.subr.mxu0 0.0
  %259 = vmatpush1.msra.mxu0 %v232
  %260 = vmatprep.subr.mxu0 0.0
  %261 = vmatpush1.msra.mxu0 %v233
  %262 = vmatprep.subr.mxu0 0.0
  %263 = vmatpush1.msra.mxu0 %v234
  %264 = vmatprep.subr.mxu0 0.0
  %265 = vmatpush1.msra.mxu0 %v235
  %266 = vmatprep.subr.mxu0 0.0
  %267 = vmatpush1.msra.mxu0 %v236
  %268 = vmatprep.subr.mxu0 0.0
  %269 = vmatpush1.msra.mxu0 %v237
  %270 = vmatprep.subr.mxu0 0.0
  %271 = vmatpush1.msra.mxu0 0.0
  %272 = vmatprep.subr.mxu0 0.0
  %273 = vmatpush1.msra.mxu0 0.0
  %274 = vmatprep.subr.mxu0 0.0
  %275 = vmatpush1.msra.mxu0 0.0
  %276 = vmatprep.subr.mxu0 0.0
  %277 = vmatpush1.msra.mxu0 0.0
  %278 = vmatprep.subr.mxu0 0.0
  %279 = vmatpush1.msra.mxu0 0.0
  %280 = vmatprep.subr.mxu0 0.0
  %281 = vmatpush1.msra.mxu0 0.0
  %282 = vmatprep.subr.mxu0 0.0
  %283 = vmatpush1.msra.mxu0 0.0
  %284 = vmatprep.subr.mxu0 0.0
  %285 = vmatpush1.msra.mxu0 0.0
  %286 = vmatprep.subr.mxu0 0.0
  %287 = vmatpush1.msra.mxu0 0.0
  %288 = vmatprep.subr.mxu0 0.0
  %289 = vmatpush1.msra.mxu0 0.0
  %290 = vmatprep.subr.mxu0 0.0
  %291 = vmatpush1.msra.mxu0 0.0
  %292 = vmatprep.subr.mxu0 0.0
  %293 = vmatpush1.msra.mxu0 0.0
  %294 = vmatprep.subr.mxu0 0.0
  %295 = vmatpush1.msra.mxu0 0.0
  %296 = vmatprep.subr.mxu0 0.0
  %297 = vmatpush1.msra.mxu0 0.0
  %298 = vmatprep.subr.mxu0 0.0
  %299 = vmatpush1.msra.mxu0 0.0
  %300 = vmatprep.subr.mxu0 0.0
  %301 = vmatpush1.msra.mxu0 0.0
  %302 = vmatprep.mubr.f32.mxu0 0.0
  %303 = vmatmul.mubr.f32.gmra.mrb[0].mxu0 %v220
  %v304 = vpop.f32.mrb[0].mxu0
  %v305 = vadd.f32 0.0, %v304
  %v306 = vpop.f32.mrb[0].mxu0
  %307 = vdwg.mxu0
  %v308 = vround.ne.pseudo %v305
  %s309 = scalar_lea.vmem %s2, 128
  %v310 = vld [vmem:[%s309] sm:$0xff]
  %v311 = vld [vmem:[%s309 + $0x8] sm:$0xff]
  %v312 = vld [vmem:[%s309 + $0x10] sm:$0xff]
  %v313 = vld [vmem:[%s309 + $0x18] sm:$0xff]
  %v314 = vld [vmem:[%s309 + $0x20] sm:$0xff]
  %v315 = vld [vmem:[%s309 + $0x28] sm:$0xff]
  %v316 = vld [vmem:[%s309 + $0x30] sm:$0xff]
  %v317 = vld [vmem:[%s309 + $0x38] sm:$0xff]
  %v318 = vld [vmem:[%s309 + $0x40] sm:$0xff]
  %v319 = vld [vmem:[%s309 + $0x48] sm:$0xff]
  %v320 = vld [vmem:[%s309 + $0x50] sm:$0xff]
  %v321 = vld [vmem:[%s309 + $0x58] sm:$0xff]
  %v322 = vld [vmem:[%s309 + $0x60] sm:$0xff]
  %v323 = vld [vmem:[%s309 + $0x68] sm:$0xff]
  %v324 = vld [vmem:[%s309 + $0x70] sm:$0xff]
  %v325 = vld [vmem:[%s309 + $0x78] sm:$0xff]
  %326 = vmatprep.subr.mxu0 0.0
  %327 = vmatpush1.msra.mxu0 %v310
  %328 = vmatprep.subr.mxu0 0.0
  %329 = vmatpush1.msra.mxu0 %v311
  %330 = vmatprep.subr.mxu0 0.0
  %331 = vmatpush1.msra.mxu0 %v312
  %332 = vmatprep.subr.mxu0 0.0
  %333 = vmatpush1.msra.mxu0 %v313
  %334 = vmatprep.subr.mxu0 0.0
  %335 = vmatpush1.msra.mxu0 %v314
  %336 = vmatprep.subr.mxu0 0.0
  %337 = vmatpush1.msra.mxu0 %v315
  %338 = vmatprep.subr.mxu0 0.0
  %339 = vmatpush1.msra.mxu0 %v316
  %340 = vmatprep.subr.mxu0 0.0
  %341 = vmatpush1.msra.mxu0 %v317
  %342 = vmatprep.subr.mxu0 0.0
  %343 = vmatpush1.msra.mxu0 %v318
  %344 = vmatprep.subr.mxu0 0.0
  %345 = vmatpush1.msra.mxu0 %v319
  %346 = vmatprep.subr.mxu0 0.0
  %347 = vmatpush1.msra.mxu0 %v320
  %348 = vmatprep.subr.mxu0 0.0
  %349 = vmatpush1.msra.mxu0 %v321
  %350 = vmatprep.subr.mxu0 0.0
  %351 = vmatpush1.msra.mxu0 %v322
  %352 = vmatprep.subr.mxu0 0.0
  %353 = vmatpush1.msra.mxu0 %v323
  %354 = vmatprep.subr.mxu0 0.0
  %355 = vmatpush1.msra.mxu0 %v324
  %356 = vmatprep.subr.mxu0 0.0
  %357 = vmatpush1.msra.mxu0 %v325
  %358 = vmatprep.subr.mxu0 0.0
  %359 = vmatpush1.msra.mxu0 0.0
  %360 = vmatprep.subr.mxu0 0.0
  %361 = vmatpush1.msra.mxu0 0.0
  %362 = vmatprep.subr.mxu0 0.0
  %363 = vmatpush1.msra.mxu0 0.0
  %364 = vmatprep.subr.mxu0 0.0
  %365 = vmatpush1.msra.mxu0 0.0
  %366 = vmatprep.subr.mxu0 0.0
  %367 = vmatpush1.msra.mxu0 0.0
  %368 = vmatprep.subr.mxu0 0.0
  %369 = vmatpush1.msra.mxu0 0.0
  %370 = vmatprep.subr.mxu0 0.0
  %371 = vmatpush1.msra.mxu0 0.0
  %372 = vmatprep.subr.mxu0 0.0
  %373 = vmatpush1.msra.mxu0 0.0
  %374 = vmatprep.subr.mxu0 0.0
  %375 = vmatpush1.msra.mxu0 0.0
  %376 = vmatprep.subr.mxu0 0.0
  %377 = vmatpush1.msra.mxu0 0.0
  %378 = vmatprep.subr.mxu0 0.0
  %379 = vmatpush1.msra.mxu0 0.0
  %380 = vmatprep.subr.mxu0 0.0
  %381 = vmatpush1.msra.mxu0 0.0
  %382 = vmatprep.subr.mxu0 0.0
  %383 = vmatpush1.msra.mxu0 0.0
  %384 = vmatprep.subr.mxu0 0.0
  %385 = vmatpush1.msra.mxu0 0.0
  %386 = vmatprep.subr.mxu0 0.0
  %387 = vmatpush1.msra.mxu0 0.0
  %388 = vmatprep.subr.mxu0 0.0
  %389 = vmatpush1.msra.mxu0 0.0
  %390 = vmatprep.mubr.f32.mxu0 0.0
  %391 = vmatmul.mubr.f32.gmra.mrb[0].mxu0 %v308
  %v392 = vpop.f32.mrb[0].mxu0
  %v393 = vadd.f32 128.0, %v392
  %v394 = vpop.f32.mrb[0].mxu0
  %395 = vdwg.mxu0
  %v396 = vsub.f32 %v45, 128.0
  %s397 = scalar_lea.vmem %s1, 256
  %v398 = vld [vmem:[%s397] sm:$0xff]
  %v399 = vld [vmem:[%s397 + $0x8] sm:$0xff]
  %v400 = vld [vmem:[%s397 + $0x10] sm:$0xff]
  %v401 = vld [vmem:[%s397 + $0x18] sm:$0xff]
  %v402 = vld [vmem:[%s397 + $0x20] sm:$0xff]
  %v403 = vld [vmem:[%s397 + $0x28] sm:$0xff]
  %v404 = vld [vmem:[%s397 + $0x30] sm:$0xff]
  %v405 = vld [vmem:[%s397 + $0x38] sm:$0xff]
  %v406 = vld [vmem:[%s397 + $0x40] sm:$0xff]
  %v407 = vld [vmem:[%s397 + $0x48] sm:$0xff]
  %v408 = vld [vmem:[%s397 + $0x50] sm:$0xff]
  %v409 = vld [vmem:[%s397 + $0x58] sm:$0xff]
  %v410 = vld [vmem:[%s397 + $0x60] sm:$0xff]
  %v411 = vld [vmem:[%s397 + $0x68] sm:$0xff]
  %v412 = vld [vmem:[%s397 + $0x70] sm:$0xff]
  %v413 = vld [vmem:[%s397 + $0x78] sm:$0xff]
  %414 = vmatprep.subr.mxu0 0.0
  %415 = vmatpush1.msra.mxu0 %v398
  %416 = vmatprep.subr.mxu0 0.0
  %417 = vmatpush1.msra.mxu0 %v399
  %418 = vmatprep.subr.mxu0 0.0
  %419 = vmatpush1.msra.mxu0 %v400
  %420 = vmatprep.subr.mxu0 0.0
  %421 = vmatpush1.msra.mxu0 %v401
  %422 = vmatprep.subr.mxu0 0.0
  %423 = vmatpush1.msra.mxu0 %v402
  %424 = vmatprep.subr.mxu0 0.0
  %425 = vmatpush1.msra.mxu0 %v403
  %426 = vmatprep.subr.mxu0 0.0
  %427 = vmatpush1.msra.mxu0 %v404
  %428 = vmatprep.subr.mxu0 0.0
  %429 = vmatpush1.msra.mxu0 %v405
  %430 = vmatprep.subr.mxu0 0.0
  %431 = vmatpush1.msra.mxu0 %v406
  %432 = vmatprep.subr.mxu0 0.0
  %433 = vmatpush1.msra.mxu0 %v407
  %434 = vmatprep.subr.mxu0 0.0
  %435 = vmatpush1.msra.mxu0 %v408
  %436 = vmatprep.subr.mxu0 0.0
  %437 = vmatpush1.msra.mxu0 %v409
  %438 = vmatprep.subr.mxu0 0.0
  %439 = vmatpush1.msra.mxu0 %v410
  %440 = vmatprep.subr.mxu0 0.0
  %441 = vmatpush1.msra.mxu0 %v411
  %442 = vmatprep.subr.mxu0 0.0
  %443 = vmatpush1.msra.mxu0 %v412
  %444 = vmatprep.subr.mxu0 0.0
  %445 = vmatpush1.msra.mxu0 %v413
  %446 = vmatprep.subr.mxu0 0.0
  %447 = vmatpush1.msra.mxu0 0.0
  %448 = vmatprep.subr.mxu0 0.0
  %449 = vmatpush1.msra.mxu0 0.0
  %450 = vmatprep.subr.mxu0 0.0
  %451 = vmatpush1.msra.mxu0 0.0
  %452 = vmatprep.subr.mxu0 0.0
  %453 = vmatpush1.msra.mxu0 0.0
  %454 = vmatprep.subr.mxu0 0.0
  %455 = vmatpush1.msra.mxu0 0.0
  %456 = vmatprep.subr.mxu0 0.0
  %457 = vmatpush1.msra.mxu0 0.0
  %458 = vmatprep.subr.mxu0 0.0
  %459 = vmatpush1.msra.mxu0 0.0
  %460 = vmatprep.subr.mxu0 0.0
  %461 = vmatpush1.msra.mxu0 0.0
  %462 = vmatprep.subr.mxu0 0.0
  %463 = vmatpush1.msra.mxu0 0.0
  %464 = vmatprep.subr.mxu0 0.0
  %465 = vmatpush1.msra.mxu0 0.0
  %466 = vmatprep.subr.mxu0 0.0
  %467 = vmatpush1.msra.mxu0 0.0
  %468 = vmatprep.subr.mxu0 0.0
  %469 = vmatpush1.msra.mxu0 0.0
  %470 = vmatprep.subr.mxu0 0.0
  %471 = vmatpush1.msra.mxu0 0.0
  %472 = vmatprep.subr.mxu0 0.0
  %473 = vmatpush1.msra.mxu0 0.0
  %474 = vmatprep.subr.mxu0 0.0
  %475 = vmatpush1.msra.mxu0 0.0
  %476 = vmatprep.subr.mxu0 0.0
  %477 = vmatpush1.msra.mxu0 0.0
  %478 = vmatprep.mubr.f32.mxu0 0.0
  %479 = vmatmul.mubr.f32.gmra.mrb[0].mxu0 %v396
  %v480 = vpop.f32.mrb[0].mxu0
  %v481 = vadd.f32 0.0, %v480
  %v482 = vpop.f32.mrb[0].mxu0
  %483 = vdwg.mxu0
  %v484 = vround.ne.pseudo %v481
  %s485 = scalar_lea.vmem %s2, 256
  %v486 = vld [vmem:[%s485] sm:$0xff]
  %v487 = vld [vmem:[%s485 + $0x8] sm:$0xff]
  %v488 = vld [vmem:[%s485 + $0x10] sm:$0xff]
  %v489 = vld [vmem:[%s485 + $0x18] sm:$0xff]
  %v490 = vld [vmem:[%s485 + $0x20] sm:$0xff]
  %v491 = vld [vmem:[%s485 + $0x28] sm:$0xff]
  %v492 = vld [vmem:[%s485 + $0x30] sm:$0xff]
  %v493 = vld [vmem:[%s485 + $0x38] sm:$0xff]
  %v494 = vld [vmem:[%s485 + $0x40] sm:$0xff]
  %v495 = vld [vmem:[%s485 + $0x48] sm:$0xff]
  %v496 = vld [vmem:[%s485 + $0x50] sm:$0xff]
  %v497 = vld [vmem:[%s485 + $0x58] sm:$0xff]
  %v498 = vld [vmem:[%s485 + $0x60] sm:$0xff]
  %v499 = vld [vmem:[%s485 + $0x68] sm:$0xff]
  %v500 = vld [vmem:[%s485 + $0x70] sm:$0xff]
  %v501 = vld [vmem:[%s485 + $0x78] sm:$0xff]
  %502 = vmatprep.subr.mxu0 0.0
  %503 = vmatpush1.msra.mxu0 %v486
  %504 = vmatprep.subr.mxu0 0.0
  %505 = vmatpush1.msra.mxu0 %v487
  %506 = vmatprep.subr.mxu0 0.0
  %507 = vmatpush1.msra.mxu0 %v488
  %508 = vmatprep.subr.mxu0 0.0
  %509 = vmatpush1.msra.mxu0 %v489
  %510 = vmatprep.subr.mxu0 0.0
  %511 = vmatpush1.msra.mxu0 %v490
  %512 = vmatprep.subr.mxu0 0.0
  %513 = vmatpush1.msra.mxu0 %v491
  %514 = vmatprep.subr.mxu0 0.0
  %515 = vmatpush1.msra.mxu0 %v492
  %516 = vmatprep.subr.mxu0 0.0
  %517 = vmatpush1.msra.mxu0 %v493
  %518 = vmatprep.subr.mxu0 0.0
  %519 = vmatpush1.msra.mxu0 %v494
  %520 = vmatprep.subr.mxu0 0.0
  %521 = vmatpush1.msra.mxu0 %v495
  %522 = vmatprep.subr.mxu0 0.0
  %523 = vmatpush1.msra.mxu0 %v496
  %524 = vmatprep.subr.mxu0 0.0
  %525 = vmatpush1.msra.mxu0 %v497
  %526 = vmatprep.subr.mxu0 0.0
  %527 = vmatpush1.msra.mxu0 %v498
  %528 = vmatprep.subr.mxu0 0.0
  %529 = vmatpush1.msra.mxu0 %v499
  %530 = vmatprep.subr.mxu0 0.0
  %531 = vmatpush1.msra.mxu0 %v500
  %532 = vmatprep.subr.mxu0 0.0
  %533 = vmatpush1.msra.mxu0 %v501
  %534 = vmatprep.subr.mxu0 0.0
  %535 = vmatpush1.msra.mxu0 0.0
  %536 = vmatprep.subr.mxu0 0.0
  %537 = vmatpush1.msra.mxu0 0.0
  %538 = vmatprep.subr.mxu0 0.0
  %539 = vmatpush1.msra.mxu0 0.0
  %540 = vmatprep.subr.mxu0 0.0
  %541 = vmatpush1.msra.mxu0 0.0
  %542 = vmatprep.subr.mxu0 0.0
  %543 = vmatpush1.msra.mxu0 0.0
  %544 = vmatprep.subr.mxu0 0.0
  %545 = vmatpush1.msra.mxu0 0.0
  %546 = vmatprep.subr.mxu0 0.0
  %547 = vmatpush1.msra.mxu0 0.0
  %548 = vmatprep.subr.mxu0 0.0
  %549 = vmatpush1.msra.mxu0 0.0
  %550 = vmatprep.subr.mxu0 0.0
  %551 = vmatpush1.msra.mxu0 0.0
  %552 = vmatprep.subr.mxu0 0.0
  %553 = vmatpush1.msra.mxu0 0.0
  %554 = vmatprep.subr.mxu0 0.0
  %555 = vmatpush1.msra.mxu0 0.0
  %556 = vmatprep.subr.mxu0 0.0
  %557 = vmatpush1.msra.mxu0 0.0
  %558 = vmatprep.subr.mxu0 0.0
  %559 = vmatpush1.msra.mxu0 0.0
  %560 = vmatprep.subr.mxu0 0.0
  %561 = vmatpush1.msra.mxu0 0.0
  %562 = vmatprep.subr.mxu0 0.0
  %563 = vmatpush1.msra.mxu0 0.0
  %564 = vmatprep.subr.mxu0 0.0
  %565 = vmatpush1.msra.mxu0 0.0
  %566 = vmatprep.mubr.f32.mxu0 0.0
  %567 = vmatmul.mubr.f32.gmra.mrb[0].mxu0 %v484
  %v568 = vpop.f32.mrb[0].mxu0
  %v569 = vadd.f32 128.0, %v568
  %v570 = vpop.f32.mrb[0].mxu0
  %571 = vdwg.mxu0
  %v572 = vsub.f32 %v217, 16.0
  %v573 = vsub.f32 %v393, 128.0
  %v574 = vsub.f32 %v569, 128.0
  %v575 = vmul.f32 %v572, 1.16438
  %v576 = vmul.f32 %v573, 3.01124e-07
  %v577 = vadd.f32 %v575, %v576
  %v578 = vmul.f32 %v574, 1.59603
  %v579 = vadd.f32 %v577, %v578
  %v580 = vround.ne.pseudo %v579
  %v581 = vmul.f32 %v580, 0.003921569
  %582 = vst [vmem:[%s3] sm:$0xff] %v581
  %v583 = vmul.f32 %v573, 0.391763
  %v584 = vsub.f32 %v575, %v583
  %v585 = vmul.f32 %v574, 0.812968
  %v586 = vsub.f32 %v584, %v585
  %v587 = vround.ne.pseudo %v586
  %v588 = vmul.f32 %v587, 0.003921569
  %s589 = scalar_lea.vmem %s3, 8
  %590 = vst [vmem:[%s589] sm:$0xff] %v588
  %v591 = vmul.f32 %v573, 2.01723
  %v592 = vadd.f32 %v575, %v591
  %v593 = vmul.f32 %v574, 3.05426e-06
  %v594 = vadd.f32 %v592, %v593
  %v595 = vround.ne.pseudo %v594
  %v596 = vmul.f32 %v595, 0.003921569
  %s597 = scalar_lea.vmem %s3, 16
  %598 = vst [vmem:[%s597] sm:$0xff] %v596
  // Predicated region
  $region14: #{jpeg_layer.1} parent=0 // pred_check
    _
  $region15: #{jpeg_layer.1} parent=0 // pred_check_branch
    %600 = sbr.rel (0) target = $region17
  $region16: #{jpeg_layer.1} parent=0 // pred_region
    _
  $region17: #{jpeg_layer.1} parent=0 // pred_fallthru
    _
  // Predicated region
  $region18: #{jpeg_layer.1} parent=0 // pred_check
    _
  $region19: #{jpeg_layer.1} parent=0 // pred_check_branch
    %602 = sbr.rel (0) target = $region21
  $region20: #{jpeg_layer.1} parent=0 // pred_region
    _
  $region21: #{jpeg_layer.1} parent=0 // pred_fallthru
    _

</llo_original>
